<compile_context>
chip_gen: v6e
topology: v6e:2x2x1
jax: 0.10.0
libtpu: 0.0.40
codegen_flags: <defaults>
</compile_context>

<pallas_src>
import functools
import math

import jax
import jax.numpy as jnp
from jax.experimental import pallas as pl
from jax.experimental.pallas import tpu as pltpu


def ghost_kernel(x_ref, w1_ref, b1_ref, w2_ref, b2_ref, o_ref,
                 *, H, W, oup, use_mxu):
    HW = H * W
    Ci = w1_ref.shape[0]
    Cin = x_ref.shape[0]
    N = x_ref.shape[1]                       # lanes in this block = (#images)*HW

    # Upcast once: v5e's VPU has no bf16 ALU; accumulate everything in f32.
    x = x_ref[...].astype(jnp.float32)       # (Cin, N)
    w1 = w1_ref[...]                         # (Ci, Cin)  f32 (BN folded)
    b1 = b1_ref[...]                         # (Ci, 1)

    # ---- primary_conv: 1x1 conv (+ folded BN) + ReLU ----------------------
    if use_mxu:
        y1 = jnp.dot(w1, x, preferred_element_type=jnp.float32)     # (Ci, N)
    else:
        # Tiny M/K: a handful of VPU broadcast FMAs beats an MXU round-trip.
        y1 = w1[:, 0:1] * x[0:1, :]
        for k in range(1, Cin):
            y1 = y1 + w1[:, k:k + 1] * x[k:k + 1, :]
    x1 = jnp.maximum(y1 + b1, 0.0)                                   # (Ci, N)

    # ---- cheap_operation: 3x3 depthwise conv (+ folded BN) + ReLU ---------
    # out[c, n] = sum_{kh,kw} tap[c, kh*3+kw] * x1[c, n + (kh-1)*W + (kw-1)]
    # realised as 8 static lane-rolls of the flattened (image-major) lane
    # axis; positions whose tap falls outside the (zero-padded) image are
    # masked, which also kills any value rolled in across an image seam.
    w2 = w2_ref[...]                         # (Ci, 9) taps (BN folded)
    b2 = b2_ref[...]                         # (Ci, 1)

    idx = jax.lax.broadcasted_iota(jnp.int32, x1.shape, 1)
    pos = idx & (HW - 1) if (HW & (HW - 1)) == 0 else idx % HW   # within-image
    if (W & (W - 1)) == 0:
        hh = pos >> (W.bit_length() - 1)
        ww = pos & (W - 1)
    else:
        hh = pos // W
        ww = pos % W
    # Boundary predicates, computed once.
    not_top = hh >= 1          # source row valid when dh == -1
    not_bot = hh < H - 1       # source row valid when dh == +1
    not_left = ww >= 1         # source col valid when dw == -1
    not_right = ww < W - 1     # source col valid when dw == +1

    # Seed the accumulator with the centre tap and the (folded-BN) bias.
    acc = w2[:, 4:5] * x1 + b2
    for kh in range(3):
        for kw in range(3):
            dh, dw = kh - 1, kw - 1
            if dh == 0 and dw == 0:
                continue
            off = dh * W + dw
            shifted = pltpu.roll(x1, shift=(-off) % N, axis=1)
            if dh < 0:
                valid = not_top
            elif dh > 0:
                valid = not_bot
            else:
                valid = None
            if dw < 0:
                valid = not_left if valid is None else (valid & not_left)
            elif dw > 0:
                valid = not_right if valid is None else (valid & not_right)
            shifted = jnp.where(valid, shifted, 0.0)
            acc = acc + w2[:, kh * 3 + kw: kh * 3 + kw + 1] * shifted
    x2 = jnp.maximum(acc, 0.0)                                       # (Ci, N)

    # ---- "concat" via two direct sublane-slice stores (no extra buffer) ---
    n_primary = min(Ci, oup)
    n_ghost = oup - n_primary
    o_ref[0:n_primary, :] = x1[:n_primary].astype(o_ref.dtype)
    if n_ghost > 0:
        o_ref[n_primary:oup, :] = x2[:n_ghost].astype(o_ref.dtype)


def ghost_module(x, w_pc, bn1, w_dw, bn2, *, oup, eps=1e-5,
                 act_dtype=None, num_blocks=None):
    """GhostModule forward (eval-mode BN).

    x:    (B, Cin, H, W) f32
    w_pc: (Ci, Cin, 1, 1) primary 1x1 conv weight (no bias)
    bn1:  (gamma, beta, running_mean, running_var), each (Ci,)
    w_dw: (Cn, 1, 3, 3) depthwise conv weight (groups = Ci, no bias)
    bn2:  (gamma, beta, running_mean, running_var), each (Cn,)
    act_dtype:  dtype of activations crossing the pallas_call boundary
                (f32 or bf16; compute is f32 inside the kernel).
    num_blocks: grid steps along the folded batch*HW lane axis.  Default 2
                for even B (uses both TCs on v7x); use 1 on single-TC parts.
    """
    B, Cin, H, W = x.shape
    HW = H * W
    Ci = w_pc.shape[0]
    Cn = w_dw.shape[0]
    assert Cn == Ci, "only ratio=2 (1:1 depthwise ghost mapping) implemented"

    act_dtype = x.dtype if act_dtype is None else jnp.dtype(act_dtype)
    if num_blocks is None:
        num_blocks = 2 if (B >= 2 and B % 2 == 0) else 1
    assert B % num_blocks == 0, "num_blocks must divide B (whole images per block)"
    N = B * HW
    blk = N // num_blocks
    assert blk % 128 == 0, "per-step lane extent must be a multiple of 128"

    # Fold eval-mode BatchNorm into the conv weights/biases (free, trace time).
    g1, be1, m1, v1 = bn1
    s1 = g1 / jnp.sqrt(v1 + eps)
    w1_eff = w_pc.reshape(Ci, Cin) * s1[:, None]              # (Ci, Cin)
    b1_eff = (be1 - m1 * s1)[:, None]                         # (Ci, 1)

    g2, be2, m2, v2 = bn2
    s2 = g2 / jnp.sqrt(v2 + eps)
    w2_eff = w_dw.reshape(Cn, 9) * s2[:, None]                # (Cn, 9)
    b2_eff = (be2 - m2 * s2)[:, None]                         # (Cn, 1)

    # Fold batch into the lane axis: (B, Cin, H, W) -> (Cin, B*HW), lane-dense.
    xr = jnp.transpose(x, (1, 0, 2, 3)).reshape(Cin, N).astype(act_dtype)

    use_mxu = (Ci >= 32 and Cin >= 32)       # tiny M/K -> VPU FMAs instead
    act_bytes = jnp.dtype(act_dtype).itemsize
    cost = pl.CostEstimate(
        flops=2 * Ci * Cin * N + 18 * Ci * N,
        transcendentals=0,
        bytes_accessed=(Cin + oup) * N * act_bytes
        + 4 * (Ci * Cin + Ci + Cn * 9 + Cn),
    )

    out = pl.pallas_call(
        functools.partial(ghost_kernel, H=H, W=W, oup=oup, use_mxu=use_mxu),
        out_shape=jax.ShapeDtypeStruct((oup, N), act_dtype),
        grid=(num_blocks,),
        in_specs=[
            pl.BlockSpec((Cin, blk), lambda i: (0, i)),
            pl.BlockSpec((Ci, Cin), lambda i: (0, 0)),
            pl.BlockSpec((Ci, 1), lambda i: (0, 0)),
            pl.BlockSpec((Cn, 9), lambda i: (0, 0)),
            pl.BlockSpec((Cn, 1), lambda i: (0, 0)),
        ],
        out_specs=pl.BlockSpec((oup, blk), lambda i: (0, i)),
        compiler_params=pltpu.CompilerParams(
            dimension_semantics=("parallel",)),
        cost_estimate=cost,
    )(xr, w1_eff, b1_eff, w2_eff, b2_eff)

    return out.reshape(oup, B, H, W).transpose(1, 0, 2, 3)


def ghost_module_ref(x, w_pc, bn1, w_dw, bn2, *, oup, eps=1e-5):
    """Pure-JAX reference with PyTorch GhostModule (eval-mode BN) semantics."""
    dn = ("NCHW", "OIHW", "NCHW")

    g1, be1, m1, v1 = bn1
    y = jax.lax.conv_general_dilated(x, w_pc, (1, 1), "VALID",
                                     dimension_numbers=dn)
    y = ((y - m1[None, :, None, None]) / jnp.sqrt(v1 + eps)[None, :, None, None]
         * g1[None, :, None, None] + be1[None, :, None, None])
    x1 = jnp.maximum(y, 0.0)

    g2, be2, m2, v2 = bn2
    Ci = x1.shape[1]
    y2 = jax.lax.conv_general_dilated(x1, w_dw, (1, 1), ((1, 1), (1, 1)),
                                      dimension_numbers=dn,
                                      feature_group_count=Ci)
    y2 = ((y2 - m2[None, :, None, None]) / jnp.sqrt(v2 + eps)[None, :, None, None]
          * g2[None, :, None, None] + be2[None, :, None, None])
    x2 = jnp.maximum(y2, 0.0)

    out = jnp.concatenate([x1, x2], axis=1)
    return out[:, :oup]


if __name__ == "__main__":
    # Small shapes consistent with the module defaults:
    # batch=2, inp=4, oup=8, kernel_size=1, ratio=2, dw_size=3, spatial=16x16.
    B, Cin, H, W = 2, 4, 16, 16
    oup, ratio = 8, 2
    Ci = math.ceil(oup / ratio)        # init_channels = 4
    Cn = Ci * (ratio - 1)              # new_channels  = 4
    eps = 1e-5

    key = jax.random.PRNGKey(0)
    ks = jax.random.split(key, 11)
    x = jax.random.normal(ks[0], (B, Cin, H, W), dtype=jnp.float32)

    w_pc = jax.random.normal(ks[1], (Ci, Cin, 1, 1), dtype=jnp.float32) * 0.5
    g1 = 1.0 + 0.1 * jax.random.normal(ks[2], (Ci,), dtype=jnp.float32)
    be1 = 0.1 * jax.random.normal(ks[3], (Ci,), dtype=jnp.float32)
    m1 = 0.1 * jax.random.normal(ks[4], (Ci,), dtype=jnp.float32)
    v1 = jax.random.uniform(ks[5], (Ci,), jnp.float32, minval=0.5, maxval=1.5)

    w_dw = jax.random.normal(ks[6], (Cn, 1, 3, 3), dtype=jnp.float32) * 0.5
    g2 = 1.0 + 0.1 * jax.random.normal(ks[7], (Cn,), dtype=jnp.float32)
    be2 = 0.1 * jax.random.normal(ks[8], (Cn,), dtype=jnp.float32)
    m2 = 0.1 * jax.random.normal(ks[9], (Cn,), dtype=jnp.float32)
    v2 = jax.random.uniform(ks[10], (Cn,), jnp.float32, minval=0.5, maxval=1.5)

    bn1 = (g1, be1, m1, v1)
    bn2 = (g2, be2, m2, v2)

    ref = ghost_module_ref(x, w_pc, bn1, w_dw, bn2, oup=oup, eps=eps)

    # f32 path, 2-way parallel grid (one lane-block per TensorCore on v7x).
    out = ghost_module(x, w_pc, bn1, w_dw, bn2, oup=oup, eps=eps)
    out = jax.block_until_ready(out)
    assert out.shape == (B, oup, H, W)
    assert jnp.allclose(out, ref, atol=1e-4, rtol=1e-4)

    # bf16 activations across the pallas_call boundary, fully folded single
    # step (the preferred configuration for single-TC v5e/v6e).
    out_bf16 = ghost_module(x, w_pc, bn1, w_dw, bn2, oup=oup, eps=eps,
                            act_dtype=jnp.bfloat16, num_blocks=1)
    out_bf16 = jax.block_until_ready(out_bf16)
    assert out_bf16.shape == (B, oup, H, W)
    assert jnp.allclose(out_bf16.astype(jnp.float32), ref, atol=5e-2, rtol=5e-2)

    print("KERNEL_OK")
</pallas_src>

<mosaic_0001>
module attributes {stable_mosaic.version = 11 : i64} {
  func.func @ghost_kernel(%arg0: i32, %arg1: memref<4x256xf32, #tpu.memory_space<vmem>>, %arg2: memref<4x4xf32, #tpu.memory_space<vmem>>, %arg3: memref<4x1xf32, #tpu.memory_space<vmem>>, %arg4: memref<4x9xf32, #tpu.memory_space<vmem>>, %arg5: memref<4x1xf32, #tpu.memory_space<vmem>>, %arg6: memref<8x256xf32, #tpu.memory_space<vmem>>) attributes {dimension_semantics = [#tpu.dimension_semantics<parallel>], iteration_bounds = array<i64: 2>, scalar_prefetch = 0 : i64, scratch_operands = 0 : i64, tpu.core_type = #tpu.core_type<tc>, window_params = [{transform_indices = @transform_0, window_bounds = array<i64: 4, 256>}, {pipeline_mode = #tpu.pipeline_mode<synchronous>, transform_indices = @transform_1, window_bounds = array<i64: 4, 4>}, {pipeline_mode = #tpu.pipeline_mode<synchronous>, transform_indices = @transform_2, window_bounds = array<i64: 4, 1>}, {pipeline_mode = #tpu.pipeline_mode<synchronous>, transform_indices = @transform_3, window_bounds = array<i64: 4, 9>}, {pipeline_mode = #tpu.pipeline_mode<synchronous>, transform_indices = @transform_4, window_bounds = array<i64: 4, 1>}, {transform_indices = @transform_5, window_bounds = array<i64: 8, 256>}]} {
    %c0 = arith.constant 0 : index
    %c0_0 = arith.constant 0 : index
    %0 = vector.load %arg1[%c0, %c0_0] : memref<4x256xf32, #tpu.memory_space<vmem>>, vector<4x256xf32>
    %c0_1 = arith.constant 0 : index
    %c0_2 = arith.constant 0 : index
    %1 = vector.load %arg2[%c0_1, %c0_2] : memref<4x4xf32, #tpu.memory_space<vmem>>, vector<4x4xf32>
    %c0_3 = arith.constant 0 : index
    %c0_4 = arith.constant 0 : index
    %2 = vector.load %arg3[%c0_3, %c0_4] : memref<4x1xf32, #tpu.memory_space<vmem>>, vector<4x1xf32>
    %3 = vector.extract_strided_slice %1 {offsets = [0, 0], sizes = [4, 1], strides = [1, 1]} : vector<4x4xf32> to vector<4x1xf32>
    %4 = vector.extract_strided_slice %0 {offsets = [0, 0], sizes = [1, 256], strides = [1, 1]} : vector<4x256xf32> to vector<1x256xf32>
    %5 = vector.broadcast %3 : vector<4x1xf32> to vector<4x256xf32>
    %6 = vector.broadcast %4 : vector<1x256xf32> to vector<4x256xf32>
    %7 = arith.mulf %5, %6 : vector<4x256xf32>
    %8 = vector.extract_strided_slice %1 {offsets = [0, 1], sizes = [4, 1], strides = [1, 1]} : vector<4x4xf32> to vector<4x1xf32>
    %9 = vector.extract_strided_slice %0 {offsets = [1, 0], sizes = [1, 256], strides = [1, 1]} : vector<4x256xf32> to vector<1x256xf32>
    %10 = vector.broadcast %8 : vector<4x1xf32> to vector<4x256xf32>
    %11 = vector.broadcast %9 : vector<1x256xf32> to vector<4x256xf32>
    %12 = arith.mulf %10, %11 : vector<4x256xf32>
    %13 = arith.addf %7, %12 : vector<4x256xf32>
    %14 = vector.extract_strided_slice %1 {offsets = [0, 2], sizes = [4, 1], strides = [1, 1]} : vector<4x4xf32> to vector<4x1xf32>
    %15 = vector.extract_strided_slice %0 {offsets = [2, 0], sizes = [1, 256], strides = [1, 1]} : vector<4x256xf32> to vector<1x256xf32>
    %16 = vector.broadcast %14 : vector<4x1xf32> to vector<4x256xf32>
    %17 = vector.broadcast %15 : vector<1x256xf32> to vector<4x256xf32>
    %18 = arith.mulf %16, %17 : vector<4x256xf32>
    %19 = arith.addf %13, %18 : vector<4x256xf32>
    %20 = vector.extract_strided_slice %1 {offsets = [0, 3], sizes = [4, 1], strides = [1, 1]} : vector<4x4xf32> to vector<4x1xf32>
    %21 = vector.extract_strided_slice %0 {offsets = [3, 0], sizes = [1, 256], strides = [1, 1]} : vector<4x256xf32> to vector<1x256xf32>
    %22 = vector.broadcast %20 : vector<4x1xf32> to vector<4x256xf32>
    %23 = vector.broadcast %21 : vector<1x256xf32> to vector<4x256xf32>
    %24 = arith.mulf %22, %23 : vector<4x256xf32>
    %25 = arith.addf %19, %24 : vector<4x256xf32>
    %26 = vector.broadcast %2 : vector<4x1xf32> to vector<4x256xf32>
    %27 = arith.addf %25, %26 : vector<4x256xf32>
    %cst = arith.constant 0.000000e+00 : f32
    %28 = vector.broadcast %cst : f32 to vector<4x256xf32>
    %29 = arith.maximumf %27, %28 : vector<4x256xf32>
    %c0_5 = arith.constant 0 : index
    %c0_6 = arith.constant 0 : index
    %30 = vector.load %arg4[%c0_5, %c0_6] : memref<4x9xf32, #tpu.memory_space<vmem>>, vector<4x9xf32>
    %c0_7 = arith.constant 0 : index
    %c0_8 = arith.constant 0 : index
    %31 = vector.load %arg5[%c0_7, %c0_8] : memref<4x1xf32, #tpu.memory_space<vmem>>, vector<4x1xf32>
    %32 = tpu.iota {dimensions = array<i32: 1>} : vector<4x256xi32>
    %c255_i32 = arith.constant 255 : i32
    %33 = vector.broadcast %c255_i32 : i32 to vector<4x256xi32>
    %34 = arith.andi %32, %33 : vector<4x256xi32>
    %c4_i32 = arith.constant 4 : i32
    %35 = vector.broadcast %c4_i32 : i32 to vector<4x256xi32>
    %36 = arith.shrsi %34, %35 : vector<4x256xi32>
    %c15_i32 = arith.constant 15 : i32
    %37 = vector.broadcast %c15_i32 : i32 to vector<4x256xi32>
    %38 = arith.andi %34, %37 : vector<4x256xi32>
    %c1_i32 = arith.constant 1 : i32
    %39 = vector.broadcast %c1_i32 : i32 to vector<4x256xi32>
    %40 = arith.cmpi sge, %36, %39 : vector<4x256xi32>
    %c15_i32_9 = arith.constant 15 : i32
    %41 = vector.broadcast %c15_i32_9 : i32 to vector<4x256xi32>
    %42 = arith.cmpi slt, %36, %41 : vector<4x256xi32>
    %c1_i32_10 = arith.constant 1 : i32
    %43 = vector.broadcast %c1_i32_10 : i32 to vector<4x256xi32>
    %44 = arith.cmpi sge, %38, %43 : vector<4x256xi32>
    %c15_i32_11 = arith.constant 15 : i32
    %45 = vector.broadcast %c15_i32_11 : i32 to vector<4x256xi32>
    %46 = arith.cmpi slt, %38, %45 : vector<4x256xi32>
    %47 = vector.extract_strided_slice %30 {offsets = [0, 4], sizes = [4, 1], strides = [1, 1]} : vector<4x9xf32> to vector<4x1xf32>
    %48 = vector.broadcast %47 : vector<4x1xf32> to vector<4x256xf32>
    %49 = arith.mulf %48, %29 : vector<4x256xf32>
    %50 = vector.broadcast %31 : vector<4x1xf32> to vector<4x256xf32>
    %51 = arith.addf %49, %50 : vector<4x256xf32>
    %c17_i32 = arith.constant 17 : i32
    %52 = tpu.dynamic_rotate %29 by %c17_i32 dim 1 : vector<4x256xf32>, i32 -> vector<4x256xf32>
    %53 = arith.andi %40, %44 : vector<4x256xi1>
    %cst_12 = arith.constant 0.000000e+00 : f32
    %54 = vector.broadcast %cst_12 : f32 to vector<4x256xf32>
    %55 = arith.select %53, %52, %54 : vector<4x256xi1>, vector<4x256xf32>
    %56 = vector.extract_strided_slice %30 {offsets = [0, 0], sizes = [4, 1], strides = [1, 1]} : vector<4x9xf32> to vector<4x1xf32>
    %57 = vector.broadcast %56 : vector<4x1xf32> to vector<4x256xf32>
    %58 = arith.mulf %57, %55 : vector<4x256xf32>
    %59 = arith.addf %51, %58 : vector<4x256xf32>
    %c16_i32 = arith.constant 16 : i32
    %60 = tpu.dynamic_rotate %29 by %c16_i32 dim 1 : vector<4x256xf32>, i32 -> vector<4x256xf32>
    %cst_13 = arith.constant 0.000000e+00 : f32
    %61 = vector.broadcast %cst_13 : f32 to vector<4x256xf32>
    %62 = arith.select %40, %60, %61 : vector<4x256xi1>, vector<4x256xf32>
    %63 = vector.extract_strided_slice %30 {offsets = [0, 1], sizes = [4, 1], strides = [1, 1]} : vector<4x9xf32> to vector<4x1xf32>
    %64 = vector.broadcast %63 : vector<4x1xf32> to vector<4x256xf32>
    %65 = arith.mulf %64, %62 : vector<4x256xf32>
    %66 = arith.addf %59, %65 : vector<4x256xf32>
    %c15_i32_14 = arith.constant 15 : i32
    %67 = tpu.dynamic_rotate %29 by %c15_i32_14 dim 1 : vector<4x256xf32>, i32 -> vector<4x256xf32>
    %68 = arith.andi %40, %46 : vector<4x256xi1>
    %cst_15 = arith.constant 0.000000e+00 : f32
    %69 = vector.broadcast %cst_15 : f32 to vector<4x256xf32>
    %70 = arith.select %68, %67, %69 : vector<4x256xi1>, vector<4x256xf32>
    %71 = vector.extract_strided_slice %30 {offsets = [0, 2], sizes = [4, 1], strides = [1, 1]} : vector<4x9xf32> to vector<4x1xf32>
    %72 = vector.broadcast %71 : vector<4x1xf32> to vector<4x256xf32>
    %73 = arith.mulf %72, %70 : vector<4x256xf32>
    %74 = arith.addf %66, %73 : vector<4x256xf32>
    %c1_i32_16 = arith.constant 1 : i32
    %75 = tpu.dynamic_rotate %29 by %c1_i32_16 dim 1 : vector<4x256xf32>, i32 -> vector<4x256xf32>
    %cst_17 = arith.constant 0.000000e+00 : f32
    %76 = vector.broadcast %cst_17 : f32 to vector<4x256xf32>
    %77 = arith.select %44, %75, %76 : vector<4x256xi1>, vector<4x256xf32>
    %78 = vector.extract_strided_slice %30 {offsets = [0, 3], sizes = [4, 1], strides = [1, 1]} : vector<4x9xf32> to vector<4x1xf32>
    %79 = vector.broadcast %78 : vector<4x1xf32> to vector<4x256xf32>
    %80 = arith.mulf %79, %77 : vector<4x256xf32>
    %81 = arith.addf %74, %80 : vector<4x256xf32>
    %c255_i32_18 = arith.constant 255 : i32
    %82 = tpu.dynamic_rotate %29 by %c255_i32_18 dim 1 : vector<4x256xf32>, i32 -> vector<4x256xf32>
    %cst_19 = arith.constant 0.000000e+00 : f32
    %83 = vector.broadcast %cst_19 : f32 to vector<4x256xf32>
    %84 = arith.select %46, %82, %83 : vector<4x256xi1>, vector<4x256xf32>
    %85 = vector.extract_strided_slice %30 {offsets = [0, 5], sizes = [4, 1], strides = [1, 1]} : vector<4x9xf32> to vector<4x1xf32>
    %86 = vector.broadcast %85 : vector<4x1xf32> to vector<4x256xf32>
    %87 = arith.mulf %86, %84 : vector<4x256xf32>
    %88 = arith.addf %81, %87 : vector<4x256xf32>
    %c241_i32 = arith.constant 241 : i32
    %89 = tpu.dynamic_rotate %29 by %c241_i32 dim 1 : vector<4x256xf32>, i32 -> vector<4x256xf32>
    %90 = arith.andi %42, %44 : vector<4x256xi1>
    %cst_20 = arith.constant 0.000000e+00 : f32
    %91 = vector.broadcast %cst_20 : f32 to vector<4x256xf32>
    %92 = arith.select %90, %89, %91 : vector<4x256xi1>, vector<4x256xf32>
    %93 = vector.extract_strided_slice %30 {offsets = [0, 6], sizes = [4, 1], strides = [1, 1]} : vector<4x9xf32> to vector<4x1xf32>
    %94 = vector.broadcast %93 : vector<4x1xf32> to vector<4x256xf32>
    %95 = arith.mulf %94, %92 : vector<4x256xf32>
    %96 = arith.addf %88, %95 : vector<4x256xf32>
    %c240_i32 = arith.constant 240 : i32
    %97 = tpu.dynamic_rotate %29 by %c240_i32 dim 1 : vector<4x256xf32>, i32 -> vector<4x256xf32>
    %cst_21 = arith.constant 0.000000e+00 : f32
    %98 = vector.broadcast %cst_21 : f32 to vector<4x256xf32>
    %99 = arith.select %42, %97, %98 : vector<4x256xi1>, vector<4x256xf32>
    %100 = vector.extract_strided_slice %30 {offsets = [0, 7], sizes = [4, 1], strides = [1, 1]} : vector<4x9xf32> to vector<4x1xf32>
    %101 = vector.broadcast %100 : vector<4x1xf32> to vector<4x256xf32>
    %102 = arith.mulf %101, %99 : vector<4x256xf32>
    %103 = arith.addf %96, %102 : vector<4x256xf32>
    %c239_i32 = arith.constant 239 : i32
    %104 = tpu.dynamic_rotate %29 by %c239_i32 dim 1 : vector<4x256xf32>, i32 -> vector<4x256xf32>
    %105 = arith.andi %42, %46 : vector<4x256xi1>
    %cst_22 = arith.constant 0.000000e+00 : f32
    %106 = vector.broadcast %cst_22 : f32 to vector<4x256xf32>
    %107 = arith.select %105, %104, %106 : vector<4x256xi1>, vector<4x256xf32>
    %108 = vector.extract_strided_slice %30 {offsets = [0, 8], sizes = [4, 1], strides = [1, 1]} : vector<4x9xf32> to vector<4x1xf32>
    %109 = vector.broadcast %108 : vector<4x1xf32> to vector<4x256xf32>
    %110 = arith.mulf %109, %107 : vector<4x256xf32>
    %111 = arith.addf %103, %110 : vector<4x256xf32>
    %cst_23 = arith.constant 0.000000e+00 : f32
    %112 = vector.broadcast %cst_23 : f32 to vector<4x256xf32>
    %113 = arith.maximumf %111, %112 : vector<4x256xf32>
    %c0_24 = arith.constant 0 : index
    %c0_25 = arith.constant 0 : index
    %114 = vector.load %arg6[%c0_24, %c0_25] : memref<8x256xf32, #tpu.memory_space<vmem>>, vector<4x256xf32>
    tpu.vector_store %arg6[%c0_24, %c0_25], %29 {strides = array<i32>} : memref<8x256xf32, #tpu.memory_space<vmem>>, vector<4x256xf32>,
    %c4 = arith.constant 4 : index
    %c0_26 = arith.constant 0 : index
    %115 = vector.load %arg6[%c4, %c0_26] : memref<8x256xf32, #tpu.memory_space<vmem>>, vector<4x256xf32>
    tpu.vector_store %arg6[%c4, %c0_26], %113 {strides = array<i32>} : memref<8x256xf32, #tpu.memory_space<vmem>>, vector<4x256xf32>,
    return
  }
  func.func @transform_0(%arg0: i32) -> (i32, i32) {
    %c0_i32 = arith.constant 0 : i32
    %c0_i32_0 = arith.constant 0 : i32
    return %c0_i32, %arg0 : i32, i32
  }
  func.func @transform_1(%arg0: i32) -> (i32, i32) {
    %c0_i32 = arith.constant 0 : i32
    %c0_i32_0 = arith.constant 0 : i32
    %c0_i32_1 = arith.constant 0 : i32
    return %c0_i32, %c0_i32_0 : i32, i32
  }
  func.func @transform_2(%arg0: i32) -> (i32, i32) {
    %c0_i32 = arith.constant 0 : i32
    %c0_i32_0 = arith.constant 0 : i32
    %c0_i32_1 = arith.constant 0 : i32
    return %c0_i32, %c0_i32_0 : i32, i32
  }
  func.func @transform_3(%arg0: i32) -> (i32, i32) {
    %c0_i32 = arith.constant 0 : i32
    %c0_i32_0 = arith.constant 0 : i32
    %c0_i32_1 = arith.constant 0 : i32
    return %c0_i32, %c0_i32_0 : i32, i32
  }
  func.func @transform_4(%arg0: i32) -> (i32, i32) {
    %c0_i32 = arith.constant 0 : i32
    %c0_i32_0 = arith.constant 0 : i32
    %c0_i32_1 = arith.constant 0 : i32
    return %c0_i32, %c0_i32_0 : i32, i32
  }
  func.func @transform_5(%arg0: i32) -> (i32, i32) {
    %c0_i32 = arith.constant 0 : i32
    %c0_i32_0 = arith.constant 0 : i32
    return %c0_i32, %arg0 : i32, i32
  }
}

</mosaic_0001>

<llo_original>
// kernel: tpu_custom_call.1
$region0: #{tpu_custom_call.1}
  #allocation0 [shape = 'u32[]', space=smem, size = 0x4, offset = 0x4, fixed_abs, tag = 'smem constant byte address 0x4 - core index']
  #allocation1 [shape = 'u32[144,128]{1,0:T(1,128)}', space=vmem, size = 0x12000, scoped, tag = 'internal scratch']
  %s0 = inlined_call_operand.hbm [shape: f32[4,512], index: 0, kind: input, shape index: {}]
  %s1 = inlined_call_operand.vmem [shape: f32[4,4], index: 1, kind: input, shape index: {}]
  %s2 = inlined_call_operand.vmem [shape: f32[4,1], index: 2, kind: input, shape index: {}]
  %s3 = inlined_call_operand.vmem [shape: f32[4,9], index: 3, kind: input, shape index: {}]
  %s4 = inlined_call_operand.vmem [shape: f32[4,1], index: 4, kind: input, shape index: {}]
  %s5 = inlined_call_operand.hbm [shape: f32[8,512], index: 5, kind: output, shape index: {}]
  %s6 = sld [smem:[#allocation0]]
  $region57: #{tpu_custom_call.1} parent=0
    _
  %s8 = ssub.s32 1, %s6
  %s9 = scalar_select 0, %s8, %s6
  $region1: #{tpu_custom_call.1} parent=0
    #allocation2 [shape = 'u8[8192]{0}', space=vmem, size = 0x2000, scoped, tag = 'input window, operand 0']
    #allocation3 [shape = 's32[2]{0}', space=sflag, size = 0x8, scoped, tag = 'scoped memory for tpu_custom_call.1']
    #allocation4 [shape = 's32[2]{0}', space=sflag, size = 0x8, scoped, tag = 'scoped memory for tpu_custom_call.1']
    #allocation5 [shape = 'u8[16384]{0}', space=vmem, size = 0x4000, scoped, tag = 'output window, operand 0']
    %10 = vsyncpa [#allocation3], 0
    %s11 = scalar_lea.sflag [#allocation3], 1
    %12 = vsyncpa %s11, 0
    %13 = vsyncpa [#allocation4], 0
    %s14 = scalar_lea.sflag [#allocation4], 1
    %15 = vsyncpa %s14, 0
    loop: start=0, step=1, limit=4
    $region2: #{tpu_custom_call.1} parent=1 // loop_pre_header
      _
    $region3: #{tpu_custom_call.1} parent=1 // loop_header
      %s17 = sphi 0, %s21
      %p18 = scmp.ge.s32.totalorder %s17, 4
      %s27 = sphi 0, %s29
      %s30 = sphi 0, %s27
      %s31 = sphi 0, %s30
      %s47 = sphi 0, %s31
      %s51 = sphi 0, %s51
      %s53 = sphi 0, %s51
      %s54 = sphi 0, %s53
      %s68 = sphi 0, %s54
      %s72 = sphi 0, %s72
      %s74 = sphi 0, %s72
      %s75 = sphi 0, %s74
      %s89 = sphi 0, %s75
      %s93 = sphi 0, %s93
      %s95 = sphi 0, %s93
      %s96 = sphi 0, %s95
      %s110 = sphi 0, %s96
      %s114 = sphi 0, %s114
      %s116 = sphi 0, %s114
      %s117 = sphi 0, %s116
      %s131 = sphi 0, %s117
      %s137 = sphi 0, %s139
      %s140 = sphi 0, %s137
      %s141 = sphi 0, %s140
      %s157 = sphi 0, %s141
    $region4: #{tpu_custom_call.1} parent=1 // loop_header_branch
      %20 = sbr.rel (%p18) target = $region8
    $region5: #{tpu_custom_call.1} parent=1 // loop_body
      %s22 = ssub.s32 %s17, 1
      %s23 = ssub.s32 %s17, 2
      %s24 = sadd.s32 %s17, 1
      %s25 = ssub.s32 %s17, %s24
      %p26 = scmp.eq.s32.totalorder %s25, 0
      %s28 = sadd.s32 %s27, 1
      %s29 = scalar_select %p26, %s27, %s28
      %p32 = pneg %p26
      %p33 = scmp.eq.s32.totalorder %s17, 1
      %p34 = por %p32, %p33
      %p35 = scmp.ne.s32.totalorder %s27, %s30
      %p36 = scmp.eq.s32.totalorder %s17, 0
      %p37 = por %p35, %p36
      %p38 = scmp.ne.s32.totalorder %s27, %s30
      %p39 = scmp.eq.s32.totalorder %s22, 1
      %p40 = por %p38, %p39
      %p41 = scmp.ne.s32.totalorder %s30, %s31
      %p42 = scmp.eq.s32.totalorder %s22, 0
      %p43 = por %p41, %p42
      %p44 = scmp.ne.s32.totalorder %s30, %s31
      %p45 = scmp.eq.s32.totalorder %s23, 1
      %p46 = por %p44, %p45
      %p48 = scmp.ne.s32.totalorder %s31, %s47
      %p49 = scmp.eq.s32.totalorder %s23, 0
      %p50 = por %p48, %p49
      %s52 = sadd.s32 %s51, 1
      %p55 = scmp.eq.s32.totalorder %s17, 1
      %p56 = scmp.ne.s32.totalorder %s51, %s53
      %p57 = scmp.eq.s32.totalorder %s17, 0
      %p58 = por %p56, %p57
      %p59 = scmp.ne.s32.totalorder %s51, %s53
      %p60 = scmp.eq.s32.totalorder %s22, 1
      %p61 = por %p59, %p60
      %p62 = scmp.ne.s32.totalorder %s53, %s54
      %p63 = scmp.eq.s32.totalorder %s22, 0
      %p64 = por %p62, %p63
      %p65 = scmp.ne.s32.totalorder %s53, %s54
      %p66 = scmp.eq.s32.totalorder %s23, 1
      %p67 = por %p65, %p66
      %p69 = scmp.ne.s32.totalorder %s54, %s68
      %p70 = scmp.eq.s32.totalorder %s23, 0
      %p71 = por %p69, %p70
      %s73 = sadd.s32 %s72, 1
      %p76 = scmp.eq.s32.totalorder %s17, 1
      %p77 = scmp.ne.s32.totalorder %s72, %s74
      %p78 = scmp.eq.s32.totalorder %s17, 0
      %p79 = por %p77, %p78
      %p80 = scmp.ne.s32.totalorder %s72, %s74
      %p81 = scmp.eq.s32.totalorder %s22, 1
      %p82 = por %p80, %p81
      %p83 = scmp.ne.s32.totalorder %s74, %s75
      %p84 = scmp.eq.s32.totalorder %s22, 0
      %p85 = por %p83, %p84
      %p86 = scmp.ne.s32.totalorder %s74, %s75
      %p87 = scmp.eq.s32.totalorder %s23, 1
      %p88 = por %p86, %p87
      %p90 = scmp.ne.s32.totalorder %s75, %s89
      %p91 = scmp.eq.s32.totalorder %s23, 0
      %p92 = por %p90, %p91
      %s94 = sadd.s32 %s93, 1
      %p97 = scmp.eq.s32.totalorder %s17, 1
      %p98 = scmp.ne.s32.totalorder %s93, %s95
      %p99 = scmp.eq.s32.totalorder %s17, 0
      %p100 = por %p98, %p99
      %p101 = scmp.ne.s32.totalorder %s93, %s95
      %p102 = scmp.eq.s32.totalorder %s22, 1
      %p103 = por %p101, %p102
      %p104 = scmp.ne.s32.totalorder %s95, %s96
      %p105 = scmp.eq.s32.totalorder %s22, 0
      %p106 = por %p104, %p105
      %p107 = scmp.ne.s32.totalorder %s95, %s96
      %p108 = scmp.eq.s32.totalorder %s23, 1
      %p109 = por %p107, %p108
      %p111 = scmp.ne.s32.totalorder %s96, %s110
      %p112 = scmp.eq.s32.totalorder %s23, 0
      %p113 = por %p111, %p112
      %s115 = sadd.s32 %s114, 1
      %p118 = scmp.eq.s32.totalorder %s17, 1
      %p119 = scmp.ne.s32.totalorder %s114, %s116
      %p120 = scmp.eq.s32.totalorder %s17, 0
      %p121 = por %p119, %p120
      %p122 = scmp.ne.s32.totalorder %s114, %s116
      %p123 = scmp.eq.s32.totalorder %s22, 1
      %p124 = por %p122, %p123
      %p125 = scmp.ne.s32.totalorder %s116, %s117
      %p126 = scmp.eq.s32.totalorder %s22, 0
      %p127 = por %p125, %p126
      %p128 = scmp.ne.s32.totalorder %s116, %s117
      %p129 = scmp.eq.s32.totalorder %s23, 1
      %p130 = por %p128, %p129
      %p132 = scmp.ne.s32.totalorder %s117, %s131
      %p133 = scmp.eq.s32.totalorder %s23, 0
      %p134 = por %p132, %p133
      %s135 = ssub.s32 %s17, %s24
      %p136 = scmp.eq.s32.totalorder %s135, 0
      %s138 = sadd.s32 %s137, 1
      %s139 = scalar_select %p136, %s137, %s138
      %p142 = pneg %p136
      %p143 = scmp.eq.s32.totalorder %s17, 1
      %p144 = por %p142, %p143
      %p145 = scmp.ne.s32.totalorder %s137, %s140
      %p146 = scmp.eq.s32.totalorder %s17, 0
      %p147 = por %p145, %p146
      %p148 = scmp.ne.s32.totalorder %s137, %s140
      %p149 = scmp.eq.s32.totalorder %s22, 1
      %p150 = por %p148, %p149
      %p151 = scmp.ne.s32.totalorder %s140, %s141
      %p152 = scmp.eq.s32.totalorder %s22, 0
      %p153 = por %p151, %p152
      %p154 = scmp.ne.s32.totalorder %s140, %s141
      %p155 = scmp.eq.s32.totalorder %s23, 1
      %p156 = por %p154, %p155
      %p158 = scmp.ne.s32.totalorder %s141, %s157
      %p159 = scmp.eq.s32.totalorder %s23, 0
      %p160 = por %p158, %p159
      %p161 = scmp.le.s32.totalorder 1, %s17
      %p162 = scmp.lt.s32.totalorder %s17, 3
      %p163 = pnand %p161, %p162
      %p164 = pneg %p163
      // Predicated region
      $region9: #{tpu_custom_call.1} parent=5 // pred_check
        _
      $region10: #{tpu_custom_call.1} parent=5 // pred_check_branch
        %166 = sbr.rel (%p163) target = $region12
      $region11: #{tpu_custom_call.1} parent=5 // pred_region
        %s167 = ssub.s32 %s17, 1
        // Predicated region
        $region13: #{tpu_custom_call.1} parent=11 // pred_check
          %p168 = pneg %p64
        $region14: #{tpu_custom_call.1} parent=11 // pred_check_branch
          %170 = sbr.rel (%p168) target = $region16
        $region15: #{tpu_custom_call.1} parent=11 // pred_region
          _
        $region16: #{tpu_custom_call.1} parent=11 // pred_fallthru
          _
        // Predicated region
        $region17: #{tpu_custom_call.1} parent=11 // pred_check
          %p171 = pneg %p85
        $region18: #{tpu_custom_call.1} parent=11 // pred_check_branch
          %173 = sbr.rel (%p171) target = $region20
        $region19: #{tpu_custom_call.1} parent=11 // pred_region
          _
        $region20: #{tpu_custom_call.1} parent=11 // pred_fallthru
          _
        // Predicated region
        $region21: #{tpu_custom_call.1} parent=11 // pred_check
          %p174 = pneg %p106
        $region22: #{tpu_custom_call.1} parent=11 // pred_check_branch
          %176 = sbr.rel (%p174) target = $region24
        $region23: #{tpu_custom_call.1} parent=11 // pred_region
          _
        $region24: #{tpu_custom_call.1} parent=11 // pred_fallthru
          _
        // Predicated region
        $region25: #{tpu_custom_call.1} parent=11 // pred_check
          %p177 = pneg %p127
        $region26: #{tpu_custom_call.1} parent=11 // pred_check_branch
          %179 = sbr.rel (%p177) target = $region28
        $region27: #{tpu_custom_call.1} parent=11 // pred_region
          _
        $region28: #{tpu_custom_call.1} parent=11 // pred_fallthru
          _
      $region12: #{tpu_custom_call.1} parent=5 // pred_fallthru
        _
      %p180 = scmp.lt.s32.totalorder %s17, 2
      // Predicated region
      $region29: #{tpu_custom_call.1} parent=5 // pred_check
        %p181 = pneg %p180
      $region30: #{tpu_custom_call.1} parent=5 // pred_check_branch
        %183 = sbr.rel (%p181) target = $region32
      $region31: #{tpu_custom_call.1} parent=5 // pred_region
        // Predicated region
        $region33: #{tpu_custom_call.1} parent=31 // pred_check
          %p184 = pneg %p37
        $region34: #{tpu_custom_call.1} parent=31 // pred_check_branch
          %186 = sbr.rel (%p184) target = $region36
        $region35: #{tpu_custom_call.1} parent=31 // pred_region
          %s187 = sand.u32 %s27, 1
          %s188 = scalar_lea.sflag [#allocation3], %s187
          %s189 = sand.u32 %s27, 1
          %s190 = smul.addr %s189, 8
          %s191 = scalar_lea.vmem [#allocation2], %s190
          %s192 = smul.u32 2, %s17
          %s194 = ssub.s32 128, 128
          %195 = vsyncadd %s188, %s194
          %s196 = smul.addr %s192, 64
          %s197 = scalar_lea.hbm %s0, %s196
          %s199 = sshll.u32 %s191, 4
          %s200 = int_to_ptr.vmem [resolvable:$true] %s199
          %202 = dma.hbm_to_vmem [thread:$0]  %s197, 128, %s200, %s188
        $region36: #{tpu_custom_call.1} parent=31 // pred_fallthru
          _
      $region32: #{tpu_custom_call.1} parent=5 // pred_fallthru
        _
      %p203 = scmp.le.s32.totalorder 1, %s17
      %p204 = scmp.lt.s32.totalorder %s17, 3
      %p205 = pnand %p203, %p204
      %p206 = pneg %p205
      // Predicated region
      $region37: #{tpu_custom_call.1} parent=5 // pred_check
        _
      $region38: #{tpu_custom_call.1} parent=5 // pred_check_branch
        %208 = sbr.rel (%p205) target = $region40
      $region39: #{tpu_custom_call.1} parent=5 // pred_region
        %s209 = ssub.s32 %s17, 1
        %s210 = sand.u32 %s30, 1
        %s211 = scalar_lea.sflag [#allocation3], %s210
        %s212 = sand.u32 %s30, 1
        %s213 = smul.addr %s212, 8
        %s214 = scalar_lea.vmem [#allocation2], %s213
        // Predicated region
        $region41: #{tpu_custom_call.1} parent=39 // pred_check
          %p215 = pneg %p43
        $region42: #{tpu_custom_call.1} parent=39 // pred_check_branch
          %217 = sbr.rel (%p215) target = $region44
        $region43: #{tpu_custom_call.1} parent=39 // pred_region
          %218 = dma.done %s211, 128
        $region44: #{tpu_custom_call.1} parent=39 // pred_fallthru
          _
        %s219 = sand.u32 %s30, 1
        %s220 = scalar_lea.sflag [#allocation3], %s219
        %s221 = sand.u32 %s30, 1
        %s222 = smul.addr %s221, 8
        %s223 = scalar_lea.vmem [#allocation2], %s222
        %p224 = pneg %p43
        %p225 = pneg %p40
        %p226 = pneg %p64
        %p227 = pneg %p61
        %p228 = pneg %p85
        %p229 = pneg %p82
        %p230 = pneg %p106
        %p231 = pneg %p103
        %p232 = pneg %p127
        %p233 = pneg %p124
        %p234 = pneg %p153
        %p235 = pneg %p150
        %s236 = sand.u32 %s140, 1
        %s237 = scalar_lea.sflag [#allocation4], %s236
        %s238 = sand.u32 %s140, 1
        %s239 = smul.addr %s238, 16
        %s240 = scalar_lea.vmem [#allocation5], %s239
        %s241 = smul.u32 2, %s22
        %s242 = smul.u32 2, %s22
        %v243 = vld [vmem:[%s214] sm:$0xff]
        %v244 = vld [vmem:[%s1] sm:$0xf]
        %v245 = vld [vmem:[%s2] sm:$0xf]
        %247 = vset.pattern.permute.xlu0 0
        %248 = vperm.xlu0 %247, %v244
        %v249 = vpop.permute.xlu0 %248
        %v252 = vlaneseq
        %v253 = vshrl.u32 %v252, 7
        %v254 = vsub.s32 0, %v253
        %v255 = vrot.slane %v243, %v254
        %v256 = vlaneseq
        %v257 = vshrl.u32 %v256, 7
        %v258 = vsub.s32 4, %v257
        %v259 = vrot.slane %v243, %v258
        %v262 = vlaneseq
        %v263 = vshrl.u32 %v262, 7
        %v264 = vsub.s32 0, %v263
        %v265 = vrot.slane %v255, %v264
        %v266 = vlaneseq
        %v267 = vshrl.u32 %v266, 7
        %v268 = vsub.s32 0, %v267
        %v269 = vrot.slane %v259, %v268
        %v270 = vmul.f32 %v249, %v265
        %v271 = vmul.f32 %v249, %v269
        %272 = vset.pattern.permute.xlu0 1
        %273 = vperm.xlu0 %272, %v244
        %v274 = vpop.permute.xlu0 %273
        %v276 = vlaneseq
        %v277 = vshrl.u32 %v276, 7
        %v278 = vsub.s32 1, %v277
        %v279 = vrot.slane %v243, %v278
        %v280 = vlaneseq
        %v281 = vshrl.u32 %v280, 7
        %v282 = vsub.s32 5, %v281
        %v283 = vrot.slane %v243, %v282
        %v286 = vlaneseq
        %v287 = vshrl.u32 %v286, 7
        %v288 = vsub.s32 1, %v287
        %v289 = vrot.slane %v279, %v288
        %v290 = vlaneseq
        %v291 = vshrl.u32 %v290, 7
        %v292 = vsub.s32 1, %v291
        %v293 = vrot.slane %v283, %v292
        %v294 = vmul.f32 %v274, %v289
        %v295 = vmul.f32 %v274, %v293
        %v296 = vadd.f32 %v270, %v294
        %v297 = vadd.f32 %v271, %v295
        %298 = vset.pattern.permute.xlu0 2
        %299 = vperm.xlu0 %298, %v244
        %v300 = vpop.permute.xlu0 %299
        %v302 = vlaneseq
        %v303 = vshrl.u32 %v302, 7
        %v304 = vsub.s32 2, %v303
        %v305 = vrot.slane %v243, %v304
        %v306 = vlaneseq
        %v307 = vshrl.u32 %v306, 7
        %v308 = vsub.s32 6, %v307
        %v309 = vrot.slane %v243, %v308
        %v312 = vlaneseq
        %v313 = vshrl.u32 %v312, 7
        %v314 = vsub.s32 2, %v313
        %v315 = vrot.slane %v305, %v314
        %v316 = vlaneseq
        %v317 = vshrl.u32 %v316, 7
        %v318 = vsub.s32 2, %v317
        %v319 = vrot.slane %v309, %v318
        %v320 = vmul.f32 %v300, %v315
        %v321 = vmul.f32 %v300, %v319
        %v322 = vadd.f32 %v296, %v320
        %v323 = vadd.f32 %v297, %v321
        %324 = vset.pattern.permute.xlu0 3
        %325 = vperm.xlu0 %324, %v244
        %v326 = vpop.permute.xlu0 %325
        %v328 = vlaneseq
        %v329 = vshrl.u32 %v328, 7
        %v330 = vsub.s32 3, %v329
        %v331 = vrot.slane %v243, %v330
        %v332 = vlaneseq
        %v333 = vshrl.u32 %v332, 7
        %v334 = vsub.s32 7, %v333
        %v335 = vrot.slane %v243, %v334
        %v338 = vlaneseq
        %v339 = vshrl.u32 %v338, 7
        %v340 = vsub.s32 3, %v339
        %v341 = vrot.slane %v331, %v340
        %v342 = vlaneseq
        %v343 = vshrl.u32 %v342, 7
        %v344 = vsub.s32 3, %v343
        %v345 = vrot.slane %v335, %v344
        %v346 = vmul.f32 %v326, %v341
        %v347 = vmul.f32 %v326, %v345
        %v348 = vadd.f32 %v322, %v346
        %v349 = vadd.f32 %v323, %v347
        %351 = vset.pattern.permute.xlu0 0
        %352 = vperm.xlu0 %351, %v245
        %v353 = vpop.permute.xlu0 %352
        %v355 = vadd.f32 %v348, %v353
        %v356 = vadd.f32 %v349, %v353
        %v357 = vmax.f32 %v355, 0.0
        %v358 = vmax.f32 %v356, 0.0
        %v359 = vld [vmem:[%s3] sm:$0xf]
        %v360 = vld [vmem:[%s4] sm:$0xf]
        %v361 = vlaneseq
        %v362 = vand.u32 %v361, 127
        %v363 = vadd.s32 %v362, 128
        %v364 = vand.u32 %v362, 255
        %v365 = vand.u32 %v363, 255
        %v366 = vshra.s32 %v364, 4
        %v367 = vshra.s32 %v365, 4
        %v368 = vand.u32 %v364, 15
        %v369 = vand.u32 %v365, 15
        %vm370 = vcmp.ge.s32.totalorder %v366, 1
        %vm371 = vcmp.ge.s32.totalorder %v367, 1
        %vm372 = vcmp.lt.s32.totalorder %v366, 15
        %vm373 = vcmp.lt.s32.totalorder %v367, 15
        %vm374 = vcmp.ge.s32.totalorder %v368, 1
        %vm375 = vcmp.ge.s32.totalorder %v369, 1
        %vm376 = vcmp.lt.s32.totalorder %v368, 15
        %vm377 = vcmp.lt.s32.totalorder %v369, 15
        %379 = vset.pattern.permute.xlu0 4
        %380 = vperm.xlu0 %379, %v359
        %v381 = vpop.permute.xlu0 %380
        %v383 = vmul.f32 %v381, %v357
        %v384 = vmul.f32 %v381, %v358
        %386 = vset.pattern.permute.xlu0 0
        %387 = vperm.xlu0 %386, %v360
        %v388 = vpop.permute.xlu0 %387
        %v390 = vadd.f32 %v383, %v388
        %v391 = vadd.f32 %v384, %v388
        %392 = vrot.lane.b32.xlu0 %v357, 17
        %v393 = vpop.permute.xlu0 %392
        %394 = vrot.lane.b32.xlu0 %v358, 17
        %v395 = vpop.permute.xlu0 %394
        %vm396 = vcmp.lt.s32.totalorder %v362, 17
        %v397 = vsel %vm396, %v393, %v395
        %v398 = vsel %vm396, %v395, %v393
        %vm399 = vmand %vm370, %vm374
        %vm400 = vmand %vm371, %vm375
        %v401 = vsel %vm399, %v398, 0.0
        %v402 = vsel %vm400, %v397, 0.0
        %403 = vset.pattern.permute.xlu0 0
        %404 = vperm.xlu0 %403, %v359
        %v405 = vpop.permute.xlu0 %404
        %v407 = vmul.f32 %v405, %v401
        %v408 = vmul.f32 %v405, %v402
        %v409 = vadd.f32 %v390, %v407
        %v410 = vadd.f32 %v391, %v408
        %411 = vrot.lane.b32.xlu0 %v357, 16
        %v412 = vpop.permute.xlu0 %411
        %413 = vrot.lane.b32.xlu0 %v358, 16
        %v414 = vpop.permute.xlu0 %413
        %vm415 = vcmp.lt.s32.totalorder %v362, 16
        %v416 = vsel %vm415, %v412, %v414
        %v417 = vsel %vm415, %v414, %v412
        %v418 = vsel %vm370, %v417, 0.0
        %v419 = vsel %vm371, %v416, 0.0
        %420 = vset.pattern.permute.xlu0 1
        %421 = vperm.xlu0 %420, %v359
        %v422 = vpop.permute.xlu0 %421
        %v424 = vmul.f32 %v422, %v418
        %v425 = vmul.f32 %v422, %v419
        %v426 = vadd.f32 %v409, %v424
        %v427 = vadd.f32 %v410, %v425
        %428 = vrot.lane.b32.xlu0 %v357, 15
        %v429 = vpop.permute.xlu0 %428
        %430 = vrot.lane.b32.xlu0 %v358, 15
        %v431 = vpop.permute.xlu0 %430
        %vm432 = vcmp.lt.s32.totalorder %v362, 15
        %v433 = vsel %vm432, %v429, %v431
        %v434 = vsel %vm432, %v431, %v429
        %vm435 = vmand %vm370, %vm376
        %vm436 = vmand %vm371, %vm377
        %v437 = vsel %vm435, %v434, 0.0
        %v438 = vsel %vm436, %v433, 0.0
        %439 = vset.pattern.permute.xlu0 2
        %440 = vperm.xlu0 %439, %v359
        %v441 = vpop.permute.xlu0 %440
        %v443 = vmul.f32 %v441, %v437
        %v444 = vmul.f32 %v441, %v438
        %v445 = vadd.f32 %v426, %v443
        %v446 = vadd.f32 %v427, %v444
        %447 = vrot.lane.b32.xlu0 %v357, 1
        %v448 = vpop.permute.xlu0 %447
        %449 = vrot.lane.b32.xlu0 %v358, 1
        %v450 = vpop.permute.xlu0 %449
        %vm451 = vcmp.lt.s32.totalorder %v362, 1
        %v452 = vsel %vm451, %v448, %v450
        %v453 = vsel %vm451, %v450, %v448
        %v454 = vsel %vm374, %v453, 0.0
        %v455 = vsel %vm375, %v452, 0.0
        %456 = vset.pattern.permute.xlu0 3
        %457 = vperm.xlu0 %456, %v359
        %v458 = vpop.permute.xlu0 %457
        %v460 = vmul.f32 %v458, %v454
        %v461 = vmul.f32 %v458, %v455
        %v462 = vadd.f32 %v445, %v460
        %v463 = vadd.f32 %v446, %v461
        %464 = vrot.lane.b32.xlu0 %v357, 127
        %v465 = vpop.permute.xlu0 %464
        %466 = vrot.lane.b32.xlu0 %v358, 127
        %v467 = vpop.permute.xlu0 %466
        %vm468 = vcmp.lt.s32.totalorder %v362, 127
        %v469 = vsel %vm468, %v465, %v467
        %v470 = vsel %vm468, %v467, %v465
        %v471 = vsel %vm376, %v469, 0.0
        %v472 = vsel %vm377, %v470, 0.0
        %473 = vset.pattern.permute.xlu0 5
        %474 = vperm.xlu0 %473, %v359
        %v475 = vpop.permute.xlu0 %474
        %v477 = vmul.f32 %v475, %v471
        %v478 = vmul.f32 %v475, %v472
        %v479 = vadd.f32 %v462, %v477
        %v480 = vadd.f32 %v463, %v478
        %481 = vrot.lane.b32.xlu0 %v357, 113
        %v482 = vpop.permute.xlu0 %481
        %483 = vrot.lane.b32.xlu0 %v358, 113
        %v484 = vpop.permute.xlu0 %483
        %vm485 = vcmp.lt.s32.totalorder %v362, 113
        %v486 = vsel %vm485, %v482, %v484
        %v487 = vsel %vm485, %v484, %v482
        %vm488 = vmand %vm372, %vm374
        %vm489 = vmand %vm373, %vm375
        %v490 = vsel %vm488, %v486, 0.0
        %v491 = vsel %vm489, %v487, 0.0
        %492 = vset.pattern.permute.xlu0 6
        %493 = vperm.xlu0 %492, %v359
        %v494 = vpop.permute.xlu0 %493
        %v496 = vmul.f32 %v494, %v490
        %v497 = vmul.f32 %v494, %v491
        %v498 = vadd.f32 %v479, %v496
        %v499 = vadd.f32 %v480, %v497
        %500 = vrot.lane.b32.xlu0 %v357, 112
        %v501 = vpop.permute.xlu0 %500
        %502 = vrot.lane.b32.xlu0 %v358, 112
        %v503 = vpop.permute.xlu0 %502
        %vm504 = vcmp.lt.s32.totalorder %v362, 112
        %v505 = vsel %vm504, %v501, %v503
        %v506 = vsel %vm504, %v503, %v501
        %v507 = vsel %vm372, %v505, 0.0
        %v508 = vsel %vm373, %v506, 0.0
        %509 = vset.pattern.permute.xlu0 7
        %510 = vperm.xlu0 %509, %v359
        %v511 = vpop.permute.xlu0 %510
        %v513 = vmul.f32 %v511, %v507
        %v514 = vmul.f32 %v511, %v508
        %v515 = vadd.f32 %v498, %v513
        %v516 = vadd.f32 %v499, %v514
        %517 = vrot.lane.b32.xlu0 %v357, 111
        %v518 = vpop.permute.xlu0 %517
        %519 = vrot.lane.b32.xlu0 %v358, 111
        %v520 = vpop.permute.xlu0 %519
        %vm521 = vcmp.lt.s32.totalorder %v362, 111
        %v522 = vsel %vm521, %v518, %v520
        %v523 = vsel %vm521, %v520, %v518
        %vm524 = vmand %vm372, %vm376
        %vm525 = vmand %vm373, %vm377
        %v526 = vsel %vm524, %v522, 0.0
        %v527 = vsel %vm525, %v523, 0.0
        %528 = vset.pattern.permute.xlu0 8
        %529 = vperm.xlu0 %528, %v359
        %v530 = vpop.permute.xlu0 %529
        %v532 = vmul.f32 %v530, %v526
        %v533 = vmul.f32 %v530, %v527
        %v534 = vadd.f32 %v515, %v532
        %v535 = vadd.f32 %v516, %v533
        %v536 = vmax.f32 %v534, 0.0
        %v537 = vmax.f32 %v535, 0.0
        %538 = vst [vmem:[%s240] sm:$0xf] %v357
        %539 = vst [vmem:[%s240 + $0x8] sm:$0xf] %v358
        %v542 = vrot.slane %v536, 4
        %v543 = vrot.slane %v537, 4
        %546 = vst [vmem:[%s240] sm:$0xf0] %v542
        %547 = vst [vmem:[%s240 + $0x8] sm:$0xf0] %v543
        %s548 = sand.u32 %s140, 1
        %s549 = scalar_lea.sflag [#allocation4], %s548
        %s550 = sand.u32 %s140, 1
        %s551 = smul.addr %s550, 16
        %s552 = scalar_lea.vmem [#allocation5], %s551
        // Predicated region
        $region45: #{tpu_custom_call.1} parent=39 // pred_check
          %p553 = pneg %p150
        $region46: #{tpu_custom_call.1} parent=39 // pred_check_branch
          %555 = sbr.rel (%p553) target = $region48
        $region47: #{tpu_custom_call.1} parent=39 // pred_region
          %s556 = smul.u32 2, %s22
          %s558 = ssub.s32 256, 256
          %559 = vsyncadd %s549, %s558
          %s560 = smul.addr %s556, 128
          %s561 = scalar_lea.hbm %s5, %s560
          %s563 = sshll.u32 %s552, 4
          %s564 = int_to_ptr.vmem [resolvable:$true] %s563
          %566 = dma.vmem_to_hbm [thread:$0]  %s564, 256, %s561, %s549
        $region48: #{tpu_custom_call.1} parent=39 // pred_fallthru
          _
      $region40: #{tpu_custom_call.1} parent=5 // pred_fallthru
        _
      %p567 = scmp.le.s32.totalorder 2, %s17
      // Predicated region
      $region49: #{tpu_custom_call.1} parent=5 // pred_check
        %p568 = pneg %p567
      $region50: #{tpu_custom_call.1} parent=5 // pred_check_branch
        %570 = sbr.rel (%p568) target = $region52
      $region51: #{tpu_custom_call.1} parent=5 // pred_region
        %s571 = ssub.s32 %s17, 2
        // Predicated region
        $region53: #{tpu_custom_call.1} parent=51 // pred_check
          %p572 = pneg %p156
        $region54: #{tpu_custom_call.1} parent=51 // pred_check_branch
          %574 = sbr.rel (%p572) target = $region56
        $region55: #{tpu_custom_call.1} parent=51 // pred_region
          %s575 = sand.u32 %s141, 1
          %s576 = scalar_lea.sflag [#allocation4], %s575
          %s577 = sand.u32 %s141, 1
          %s578 = smul.addr %s577, 16
          %s579 = scalar_lea.vmem [#allocation5], %s578
          %580 = dma.done %s576, 256
        $region56: #{tpu_custom_call.1} parent=51 // pred_fallthru
          _
      $region52: #{tpu_custom_call.1} parent=5 // pred_fallthru
        _
    $region6: #{tpu_custom_call.1} parent=1 // loop_footer
      %s21 = sadd.s32 1, %s17
    $region7: #{tpu_custom_call.1} parent=1 // loop_footer_branch
      %16 = sbr.rel target = $region3
    $region8: #{tpu_custom_call.1} parent=1 // loop_exit
      _
    %581 = vsyncpa [#allocation3], 1
    %s582 = scalar_lea.sflag [#allocation3], 1
    %583 = vsyncpa %s582, 1
    %584 = vsyncpa [#allocation4], 1
    %s585 = scalar_lea.sflag [#allocation4], 1
    %586 = vsyncpa %s585, 1

</llo_original>
